<compile_context>
chip_gen: v6e
topology: v6e:2x2x1
jax: 0.10.0
libtpu: 0.0.40
codegen_flags: <defaults>
</compile_context>

<pallas_src>
import functools
import math

import jax
import jax.numpy as jnp
from jax.experimental import pallas as pl
from jax.experimental.pallas import tpu as pltpu


def _embedding_gather_kernel(idx_ref, table_ref, out_ref, row_buf, sem, *,
                             rows_per_block):
    """Gather `rows_per_block` table rows (indices read from SMEM) into one tile."""
    base = pl.program_id(0) * rows_per_block
    copies = []
    # Issue every row DMA before waiting on any -> all transfers are in flight at once.
    for r in range(rows_per_block):            # static unroll
        row = idx_ref[base + r]                # scalar read from SMEM (prefetched)
        cp = pltpu.make_async_copy(
            table_ref.at[pl.ds(row, 1), :],    # one row; table stays in HBM
            row_buf.at[pl.ds(r, 1), :],
            sem,                               # shared scalar DMA semaphore
        )
        cp.start()
        copies.append(cp)
    for cp in copies:                          # identical sizes -> shared sem is exact
        cp.wait()
    out_ref[...] = row_buf[...]                # dense (rows_per_block, D) store


def item_dbook_forward(publisher_idx, table, *, max_rows_per_block=64):
    """publisher_idx: int array of any shape; table: (V, D) embedding table.
    Returns embeddings of shape publisher_idx.shape + (D,)."""
    orig_shape = publisher_idx.shape
    _, d = table.shape
    n = math.prod(orig_shape) if orig_shape else 1

    # Pick the block size: whole problem in one step when small, VMEM-bounded otherwise.
    itemsize = jnp.dtype(table.dtype).itemsize
    n8 = ((n + 7) // 8) * 8                                   # sublane-aligned
    vmem_budget = 8 * 1024 * 1024                             # scratch + 2x out buffers
    rows_cap = max(8, (vmem_budget // (3 * d * itemsize)) // 8 * 8)
    rows_per_block = int(min(n8, max_rows_per_block, rows_cap))

    idx_flat = publisher_idx.reshape(-1).astype(jnp.int32)
    n_pad = pl.cdiv(n, rows_per_block) * rows_per_block
    if n_pad != n:
        # pad with a valid row index (0); padded rows are sliced off below
        idx_flat = jnp.concatenate(
            [idx_flat, jnp.zeros((n_pad - n,), jnp.int32)])

    grid = (n_pad // rows_per_block,)
    kernel = functools.partial(_embedding_gather_kernel,
                               rows_per_block=rows_per_block)

    out = pl.pallas_call(
        kernel,
        out_shape=jax.ShapeDtypeStruct((n_pad, d), table.dtype),
        grid_spec=pltpu.PrefetchScalarGridSpec(
            num_scalar_prefetch=1,                          # indices -> SMEM
            grid=grid,
            in_specs=[pl.BlockSpec(memory_space=pl.ANY)],   # table stays in HBM
            out_specs=pl.BlockSpec((rows_per_block, d),
                                   lambda i, idx_ref: (i, 0)),
            scratch_shapes=[
                pltpu.VMEM((rows_per_block, d), table.dtype),
                pltpu.SemaphoreType.DMA,                    # single shared DMA sem
            ],
        ),
        compiler_params=pltpu.CompilerParams(
            dimension_semantics=("parallel",)),             # split N across cores
    )(idx_flat, table)

    return out[:n].reshape(*orig_shape, d)


if __name__ == "__main__":
    # Small synthetic config consistent with the module.
    num_publisher = 65                     # config.num_publisher
    embedding_dim = 128                    # config.embedding_dim (lane-dense)
    v = num_publisher - 1                  # module uses num_publisher - 1 rows
    batch, seq = 2, 8                      # arbitrary index shape, like nn.Embedding

    key = jax.random.PRNGKey(0)
    k_table, k_idx = jax.random.split(key)

    # torch.nn.Embedding default init ~ N(0, 1)
    table = jax.random.normal(k_table, (v, embedding_dim), dtype=jnp.float32)
    publisher_idx = jax.random.randint(k_idx, (batch, seq), 0, v, dtype=jnp.int32)

    out = item_dbook_forward(publisher_idx, table)
    out = jax.block_until_ready(out)

    # Sanity check against plain JAX gather (row copies must be bit-exact).
    ref = jnp.take(table, publisher_idx, axis=0)
    assert out.shape == (batch, seq, embedding_dim)
    assert jnp.array_equal(out, ref)

    print("KERNEL_OK")
</pallas_src>

<mosaic_0001>
module attributes {stable_mosaic.version = 11 : i64} {
  func.func @_embedding_gather_kernel(%arg0: i32, %arg1: memref<16xi32, #tpu.memory_space<smem>>, %arg2: memref<64x128xf32, #tpu.memory_space<any>>, %arg3: memref<16x128xf32, #tpu.memory_space<vmem>>, %arg4: memref<16x128xf32, #tpu.memory_space<vmem>>, %arg5: memref<!tpu.dma_semaphore, #tpu.memory_space<semaphore_mem>>) attributes {dimension_semantics = [#tpu.dimension_semantics<parallel>], iteration_bounds = array<i64: 1>, scalar_prefetch = 1 : i64, scratch_operands = 2 : i64, tpu.core_type = #tpu.core_type<tc>, window_params = [{}, {transform_indices = @transform_1, window_bounds = array<i64: 16, 128>}]} {
    %c16_i32 = arith.constant 16 : i32
    %0 = arith.muli %arg0, %c16_i32 : i32
    %c0_i32 = arith.constant 0 : i32
    %1 = arith.addi %0, %c0_i32 : i32
    %2 = arith.index_cast %1 : i32 to index
    %3 = memref.load %arg1[%2] : memref<16xi32, #tpu.memory_space<smem>>
    %c0_i32_0 = arith.constant 0 : i32
    %4 = tpu.memref_slice %arg2[%3, %c0_i32_0] : memref<64x128xf32, #tpu.memory_space<any>> -> memref<1x128xf32, #tpu.memory_space<any>>
    %c0_i32_1 = arith.constant 0 : i32
    %c0_i32_2 = arith.constant 0 : i32
    %5 = tpu.memref_slice %arg4[%c0_i32_1, %c0_i32_2] : memref<16x128xf32, #tpu.memory_space<vmem>> -> memref<1x128xf32, #tpu.memory_space<vmem>>
    tpu.enqueue_dma source(%4 : memref<1x128xf32, #tpu.memory_space<any>>) target(%5 : memref<1x128xf32, #tpu.memory_space<vmem>>) target_semaphore(%arg5 : memref<!tpu.dma_semaphore, #tpu.memory_space<semaphore_mem>>)
    %c1_i32 = arith.constant 1 : i32
    %6 = arith.addi %0, %c1_i32 : i32
    %7 = arith.index_cast %6 : i32 to index
    %8 = memref.load %arg1[%7] : memref<16xi32, #tpu.memory_space<smem>>
    %c0_i32_3 = arith.constant 0 : i32
    %9 = tpu.memref_slice %arg2[%8, %c0_i32_3] : memref<64x128xf32, #tpu.memory_space<any>> -> memref<1x128xf32, #tpu.memory_space<any>>
    %c1_i32_4 = arith.constant 1 : i32
    %c0_i32_5 = arith.constant 0 : i32
    %10 = tpu.memref_slice %arg4[%c1_i32_4, %c0_i32_5] : memref<16x128xf32, #tpu.memory_space<vmem>> -> memref<1x128xf32, #tpu.memory_space<vmem>>
    tpu.enqueue_dma source(%9 : memref<1x128xf32, #tpu.memory_space<any>>) target(%10 : memref<1x128xf32, #tpu.memory_space<vmem>>) target_semaphore(%arg5 : memref<!tpu.dma_semaphore, #tpu.memory_space<semaphore_mem>>)
    %c2_i32 = arith.constant 2 : i32
    %11 = arith.addi %0, %c2_i32 : i32
    %12 = arith.index_cast %11 : i32 to index
    %13 = memref.load %arg1[%12] : memref<16xi32, #tpu.memory_space<smem>>
    %c0_i32_6 = arith.constant 0 : i32
    %14 = tpu.memref_slice %arg2[%13, %c0_i32_6] : memref<64x128xf32, #tpu.memory_space<any>> -> memref<1x128xf32, #tpu.memory_space<any>>
    %c2_i32_7 = arith.constant 2 : i32
    %c0_i32_8 = arith.constant 0 : i32
    %15 = tpu.memref_slice %arg4[%c2_i32_7, %c0_i32_8] : memref<16x128xf32, #tpu.memory_space<vmem>> -> memref<1x128xf32, #tpu.memory_space<vmem>>
    tpu.enqueue_dma source(%14 : memref<1x128xf32, #tpu.memory_space<any>>) target(%15 : memref<1x128xf32, #tpu.memory_space<vmem>>) target_semaphore(%arg5 : memref<!tpu.dma_semaphore, #tpu.memory_space<semaphore_mem>>)
    %c3_i32 = arith.constant 3 : i32
    %16 = arith.addi %0, %c3_i32 : i32
    %17 = arith.index_cast %16 : i32 to index
    %18 = memref.load %arg1[%17] : memref<16xi32, #tpu.memory_space<smem>>
    %c0_i32_9 = arith.constant 0 : i32
    %19 = tpu.memref_slice %arg2[%18, %c0_i32_9] : memref<64x128xf32, #tpu.memory_space<any>> -> memref<1x128xf32, #tpu.memory_space<any>>
    %c3_i32_10 = arith.constant 3 : i32
    %c0_i32_11 = arith.constant 0 : i32
    %20 = tpu.memref_slice %arg4[%c3_i32_10, %c0_i32_11] : memref<16x128xf32, #tpu.memory_space<vmem>> -> memref<1x128xf32, #tpu.memory_space<vmem>>
    tpu.enqueue_dma source(%19 : memref<1x128xf32, #tpu.memory_space<any>>) target(%20 : memref<1x128xf32, #tpu.memory_space<vmem>>) target_semaphore(%arg5 : memref<!tpu.dma_semaphore, #tpu.memory_space<semaphore_mem>>)
    %c4_i32 = arith.constant 4 : i32
    %21 = arith.addi %0, %c4_i32 : i32
    %22 = arith.index_cast %21 : i32 to index
    %23 = memref.load %arg1[%22] : memref<16xi32, #tpu.memory_space<smem>>
    %c0_i32_12 = arith.constant 0 : i32
    %24 = tpu.memref_slice %arg2[%23, %c0_i32_12] : memref<64x128xf32, #tpu.memory_space<any>> -> memref<1x128xf32, #tpu.memory_space<any>>
    %c4_i32_13 = arith.constant 4 : i32
    %c0_i32_14 = arith.constant 0 : i32
    %25 = tpu.memref_slice %arg4[%c4_i32_13, %c0_i32_14] : memref<16x128xf32, #tpu.memory_space<vmem>> -> memref<1x128xf32, #tpu.memory_space<vmem>>
    tpu.enqueue_dma source(%24 : memref<1x128xf32, #tpu.memory_space<any>>) target(%25 : memref<1x128xf32, #tpu.memory_space<vmem>>) target_semaphore(%arg5 : memref<!tpu.dma_semaphore, #tpu.memory_space<semaphore_mem>>)
    %c5_i32 = arith.constant 5 : i32
    %26 = arith.addi %0, %c5_i32 : i32
    %27 = arith.index_cast %26 : i32 to index
    %28 = memref.load %arg1[%27] : memref<16xi32, #tpu.memory_space<smem>>
    %c0_i32_15 = arith.constant 0 : i32
    %29 = tpu.memref_slice %arg2[%28, %c0_i32_15] : memref<64x128xf32, #tpu.memory_space<any>> -> memref<1x128xf32, #tpu.memory_space<any>>
    %c5_i32_16 = arith.constant 5 : i32
    %c0_i32_17 = arith.constant 0 : i32
    %30 = tpu.memref_slice %arg4[%c5_i32_16, %c0_i32_17] : memref<16x128xf32, #tpu.memory_space<vmem>> -> memref<1x128xf32, #tpu.memory_space<vmem>>
    tpu.enqueue_dma source(%29 : memref<1x128xf32, #tpu.memory_space<any>>) target(%30 : memref<1x128xf32, #tpu.memory_space<vmem>>) target_semaphore(%arg5 : memref<!tpu.dma_semaphore, #tpu.memory_space<semaphore_mem>>)
    %c6_i32 = arith.constant 6 : i32
    %31 = arith.addi %0, %c6_i32 : i32
    %32 = arith.index_cast %31 : i32 to index
    %33 = memref.load %arg1[%32] : memref<16xi32, #tpu.memory_space<smem>>
    %c0_i32_18 = arith.constant 0 : i32
    %34 = tpu.memref_slice %arg2[%33, %c0_i32_18] : memref<64x128xf32, #tpu.memory_space<any>> -> memref<1x128xf32, #tpu.memory_space<any>>
    %c6_i32_19 = arith.constant 6 : i32
    %c0_i32_20 = arith.constant 0 : i32
    %35 = tpu.memref_slice %arg4[%c6_i32_19, %c0_i32_20] : memref<16x128xf32, #tpu.memory_space<vmem>> -> memref<1x128xf32, #tpu.memory_space<vmem>>
    tpu.enqueue_dma source(%34 : memref<1x128xf32, #tpu.memory_space<any>>) target(%35 : memref<1x128xf32, #tpu.memory_space<vmem>>) target_semaphore(%arg5 : memref<!tpu.dma_semaphore, #tpu.memory_space<semaphore_mem>>)
    %c7_i32 = arith.constant 7 : i32
    %36 = arith.addi %0, %c7_i32 : i32
    %37 = arith.index_cast %36 : i32 to index
    %38 = memref.load %arg1[%37] : memref<16xi32, #tpu.memory_space<smem>>
    %c0_i32_21 = arith.constant 0 : i32
    %39 = tpu.memref_slice %arg2[%38, %c0_i32_21] : memref<64x128xf32, #tpu.memory_space<any>> -> memref<1x128xf32, #tpu.memory_space<any>>
    %c7_i32_22 = arith.constant 7 : i32
    %c0_i32_23 = arith.constant 0 : i32
    %40 = tpu.memref_slice %arg4[%c7_i32_22, %c0_i32_23] : memref<16x128xf32, #tpu.memory_space<vmem>> -> memref<1x128xf32, #tpu.memory_space<vmem>>
    tpu.enqueue_dma source(%39 : memref<1x128xf32, #tpu.memory_space<any>>) target(%40 : memref<1x128xf32, #tpu.memory_space<vmem>>) target_semaphore(%arg5 : memref<!tpu.dma_semaphore, #tpu.memory_space<semaphore_mem>>)
    %c8_i32 = arith.constant 8 : i32
    %41 = arith.addi %0, %c8_i32 : i32
    %42 = arith.index_cast %41 : i32 to index
    %43 = memref.load %arg1[%42] : memref<16xi32, #tpu.memory_space<smem>>
    %c0_i32_24 = arith.constant 0 : i32
    %44 = tpu.memref_slice %arg2[%43, %c0_i32_24] : memref<64x128xf32, #tpu.memory_space<any>> -> memref<1x128xf32, #tpu.memory_space<any>>
    %c8_i32_25 = arith.constant 8 : i32
    %c0_i32_26 = arith.constant 0 : i32
    %45 = tpu.memref_slice %arg4[%c8_i32_25, %c0_i32_26] : memref<16x128xf32, #tpu.memory_space<vmem>> -> memref<1x128xf32, #tpu.memory_space<vmem>>
    tpu.enqueue_dma source(%44 : memref<1x128xf32, #tpu.memory_space<any>>) target(%45 : memref<1x128xf32, #tpu.memory_space<vmem>>) target_semaphore(%arg5 : memref<!tpu.dma_semaphore, #tpu.memory_space<semaphore_mem>>)
    %c9_i32 = arith.constant 9 : i32
    %46 = arith.addi %0, %c9_i32 : i32
    %47 = arith.index_cast %46 : i32 to index
    %48 = memref.load %arg1[%47] : memref<16xi32, #tpu.memory_space<smem>>
    %c0_i32_27 = arith.constant 0 : i32
    %49 = tpu.memref_slice %arg2[%48, %c0_i32_27] : memref<64x128xf32, #tpu.memory_space<any>> -> memref<1x128xf32, #tpu.memory_space<any>>
    %c9_i32_28 = arith.constant 9 : i32
    %c0_i32_29 = arith.constant 0 : i32
    %50 = tpu.memref_slice %arg4[%c9_i32_28, %c0_i32_29] : memref<16x128xf32, #tpu.memory_space<vmem>> -> memref<1x128xf32, #tpu.memory_space<vmem>>
    tpu.enqueue_dma source(%49 : memref<1x128xf32, #tpu.memory_space<any>>) target(%50 : memref<1x128xf32, #tpu.memory_space<vmem>>) target_semaphore(%arg5 : memref<!tpu.dma_semaphore, #tpu.memory_space<semaphore_mem>>)
    %c10_i32 = arith.constant 10 : i32
    %51 = arith.addi %0, %c10_i32 : i32
    %52 = arith.index_cast %51 : i32 to index
    %53 = memref.load %arg1[%52] : memref<16xi32, #tpu.memory_space<smem>>
    %c0_i32_30 = arith.constant 0 : i32
    %54 = tpu.memref_slice %arg2[%53, %c0_i32_30] : memref<64x128xf32, #tpu.memory_space<any>> -> memref<1x128xf32, #tpu.memory_space<any>>
    %c10_i32_31 = arith.constant 10 : i32
    %c0_i32_32 = arith.constant 0 : i32
    %55 = tpu.memref_slice %arg4[%c10_i32_31, %c0_i32_32] : memref<16x128xf32, #tpu.memory_space<vmem>> -> memref<1x128xf32, #tpu.memory_space<vmem>>
    tpu.enqueue_dma source(%54 : memref<1x128xf32, #tpu.memory_space<any>>) target(%55 : memref<1x128xf32, #tpu.memory_space<vmem>>) target_semaphore(%arg5 : memref<!tpu.dma_semaphore, #tpu.memory_space<semaphore_mem>>)
    %c11_i32 = arith.constant 11 : i32
    %56 = arith.addi %0, %c11_i32 : i32
    %57 = arith.index_cast %56 : i32 to index
    %58 = memref.load %arg1[%57] : memref<16xi32, #tpu.memory_space<smem>>
    %c0_i32_33 = arith.constant 0 : i32
    %59 = tpu.memref_slice %arg2[%58, %c0_i32_33] : memref<64x128xf32, #tpu.memory_space<any>> -> memref<1x128xf32, #tpu.memory_space<any>>
    %c11_i32_34 = arith.constant 11 : i32
    %c0_i32_35 = arith.constant 0 : i32
    %60 = tpu.memref_slice %arg4[%c11_i32_34, %c0_i32_35] : memref<16x128xf32, #tpu.memory_space<vmem>> -> memref<1x128xf32, #tpu.memory_space<vmem>>
    tpu.enqueue_dma source(%59 : memref<1x128xf32, #tpu.memory_space<any>>) target(%60 : memref<1x128xf32, #tpu.memory_space<vmem>>) target_semaphore(%arg5 : memref<!tpu.dma_semaphore, #tpu.memory_space<semaphore_mem>>)
    %c12_i32 = arith.constant 12 : i32
    %61 = arith.addi %0, %c12_i32 : i32
    %62 = arith.index_cast %61 : i32 to index
    %63 = memref.load %arg1[%62] : memref<16xi32, #tpu.memory_space<smem>>
    %c0_i32_36 = arith.constant 0 : i32
    %64 = tpu.memref_slice %arg2[%63, %c0_i32_36] : memref<64x128xf32, #tpu.memory_space<any>> -> memref<1x128xf32, #tpu.memory_space<any>>
    %c12_i32_37 = arith.constant 12 : i32
    %c0_i32_38 = arith.constant 0 : i32
    %65 = tpu.memref_slice %arg4[%c12_i32_37, %c0_i32_38] : memref<16x128xf32, #tpu.memory_space<vmem>> -> memref<1x128xf32, #tpu.memory_space<vmem>>
    tpu.enqueue_dma source(%64 : memref<1x128xf32, #tpu.memory_space<any>>) target(%65 : memref<1x128xf32, #tpu.memory_space<vmem>>) target_semaphore(%arg5 : memref<!tpu.dma_semaphore, #tpu.memory_space<semaphore_mem>>)
    %c13_i32 = arith.constant 13 : i32
    %66 = arith.addi %0, %c13_i32 : i32
    %67 = arith.index_cast %66 : i32 to index
    %68 = memref.load %arg1[%67] : memref<16xi32, #tpu.memory_space<smem>>
    %c0_i32_39 = arith.constant 0 : i32
    %69 = tpu.memref_slice %arg2[%68, %c0_i32_39] : memref<64x128xf32, #tpu.memory_space<any>> -> memref<1x128xf32, #tpu.memory_space<any>>
    %c13_i32_40 = arith.constant 13 : i32
    %c0_i32_41 = arith.constant 0 : i32
    %70 = tpu.memref_slice %arg4[%c13_i32_40, %c0_i32_41] : memref<16x128xf32, #tpu.memory_space<vmem>> -> memref<1x128xf32, #tpu.memory_space<vmem>>
    tpu.enqueue_dma source(%69 : memref<1x128xf32, #tpu.memory_space<any>>) target(%70 : memref<1x128xf32, #tpu.memory_space<vmem>>) target_semaphore(%arg5 : memref<!tpu.dma_semaphore, #tpu.memory_space<semaphore_mem>>)
    %c14_i32 = arith.constant 14 : i32
    %71 = arith.addi %0, %c14_i32 : i32
    %72 = arith.index_cast %71 : i32 to index
    %73 = memref.load %arg1[%72] : memref<16xi32, #tpu.memory_space<smem>>
    %c0_i32_42 = arith.constant 0 : i32
    %74 = tpu.memref_slice %arg2[%73, %c0_i32_42] : memref<64x128xf32, #tpu.memory_space<any>> -> memref<1x128xf32, #tpu.memory_space<any>>
    %c14_i32_43 = arith.constant 14 : i32
    %c0_i32_44 = arith.constant 0 : i32
    %75 = tpu.memref_slice %arg4[%c14_i32_43, %c0_i32_44] : memref<16x128xf32, #tpu.memory_space<vmem>> -> memref<1x128xf32, #tpu.memory_space<vmem>>
    tpu.enqueue_dma source(%74 : memref<1x128xf32, #tpu.memory_space<any>>) target(%75 : memref<1x128xf32, #tpu.memory_space<vmem>>) target_semaphore(%arg5 : memref<!tpu.dma_semaphore, #tpu.memory_space<semaphore_mem>>)
    %c15_i32 = arith.constant 15 : i32
    %76 = arith.addi %0, %c15_i32 : i32
    %77 = arith.index_cast %76 : i32 to index
    %78 = memref.load %arg1[%77] : memref<16xi32, #tpu.memory_space<smem>>
    %c0_i32_45 = arith.constant 0 : i32
    %79 = tpu.memref_slice %arg2[%78, %c0_i32_45] : memref<64x128xf32, #tpu.memory_space<any>> -> memref<1x128xf32, #tpu.memory_space<any>>
    %c15_i32_46 = arith.constant 15 : i32
    %c0_i32_47 = arith.constant 0 : i32
    %80 = tpu.memref_slice %arg4[%c15_i32_46, %c0_i32_47] : memref<16x128xf32, #tpu.memory_space<vmem>> -> memref<1x128xf32, #tpu.memory_space<vmem>>
    tpu.enqueue_dma source(%79 : memref<1x128xf32, #tpu.memory_space<any>>) target(%80 : memref<1x128xf32, #tpu.memory_space<vmem>>) target_semaphore(%arg5 : memref<!tpu.dma_semaphore, #tpu.memory_space<semaphore_mem>>)
    %c0_i32_48 = arith.constant 0 : i32
    %81 = tpu.memref_slice %arg2[%3, %c0_i32_48] : memref<64x128xf32, #tpu.memory_space<any>> -> memref<1x128xf32, #tpu.memory_space<any>>
    %c0_i32_49 = arith.constant 0 : i32
    %c0_i32_50 = arith.constant 0 : i32
    %82 = tpu.memref_slice %arg4[%c0_i32_49, %c0_i32_50] : memref<16x128xf32, #tpu.memory_space<vmem>> -> memref<1x128xf32, #tpu.memory_space<vmem>>
    tpu.wait_dma2 semaphore(%arg5 : memref<!tpu.dma_semaphore, #tpu.memory_space<semaphore_mem>>) src(%81 : memref<1x128xf32, #tpu.memory_space<any>>) dst(%82 : memref<1x128xf32, #tpu.memory_space<vmem>>)
    %c0_i32_51 = arith.constant 0 : i32
    %83 = tpu.memref_slice %arg2[%8, %c0_i32_51] : memref<64x128xf32, #tpu.memory_space<any>> -> memref<1x128xf32, #tpu.memory_space<any>>
    %c1_i32_52 = arith.constant 1 : i32
    %c0_i32_53 = arith.constant 0 : i32
    %84 = tpu.memref_slice %arg4[%c1_i32_52, %c0_i32_53] : memref<16x128xf32, #tpu.memory_space<vmem>> -> memref<1x128xf32, #tpu.memory_space<vmem>>
    tpu.wait_dma2 semaphore(%arg5 : memref<!tpu.dma_semaphore, #tpu.memory_space<semaphore_mem>>) src(%83 : memref<1x128xf32, #tpu.memory_space<any>>) dst(%84 : memref<1x128xf32, #tpu.memory_space<vmem>>)
    %c0_i32_54 = arith.constant 0 : i32
    %85 = tpu.memref_slice %arg2[%13, %c0_i32_54] : memref<64x128xf32, #tpu.memory_space<any>> -> memref<1x128xf32, #tpu.memory_space<any>>
    %c2_i32_55 = arith.constant 2 : i32
    %c0_i32_56 = arith.constant 0 : i32
    %86 = tpu.memref_slice %arg4[%c2_i32_55, %c0_i32_56] : memref<16x128xf32, #tpu.memory_space<vmem>> -> memref<1x128xf32, #tpu.memory_space<vmem>>
    tpu.wait_dma2 semaphore(%arg5 : memref<!tpu.dma_semaphore, #tpu.memory_space<semaphore_mem>>) src(%85 : memref<1x128xf32, #tpu.memory_space<any>>) dst(%86 : memref<1x128xf32, #tpu.memory_space<vmem>>)
    %c0_i32_57 = arith.constant 0 : i32
    %87 = tpu.memref_slice %arg2[%18, %c0_i32_57] : memref<64x128xf32, #tpu.memory_space<any>> -> memref<1x128xf32, #tpu.memory_space<any>>
    %c3_i32_58 = arith.constant 3 : i32
    %c0_i32_59 = arith.constant 0 : i32
    %88 = tpu.memref_slice %arg4[%c3_i32_58, %c0_i32_59] : memref<16x128xf32, #tpu.memory_space<vmem>> -> memref<1x128xf32, #tpu.memory_space<vmem>>
    tpu.wait_dma2 semaphore(%arg5 : memref<!tpu.dma_semaphore, #tpu.memory_space<semaphore_mem>>) src(%87 : memref<1x128xf32, #tpu.memory_space<any>>) dst(%88 : memref<1x128xf32, #tpu.memory_space<vmem>>)
    %c0_i32_60 = arith.constant 0 : i32
    %89 = tpu.memref_slice %arg2[%23, %c0_i32_60] : memref<64x128xf32, #tpu.memory_space<any>> -> memref<1x128xf32, #tpu.memory_space<any>>
    %c4_i32_61 = arith.constant 4 : i32
    %c0_i32_62 = arith.constant 0 : i32
    %90 = tpu.memref_slice %arg4[%c4_i32_61, %c0_i32_62] : memref<16x128xf32, #tpu.memory_space<vmem>> -> memref<1x128xf32, #tpu.memory_space<vmem>>
    tpu.wait_dma2 semaphore(%arg5 : memref<!tpu.dma_semaphore, #tpu.memory_space<semaphore_mem>>) src(%89 : memref<1x128xf32, #tpu.memory_space<any>>) dst(%90 : memref<1x128xf32, #tpu.memory_space<vmem>>)
    %c0_i32_63 = arith.constant 0 : i32
    %91 = tpu.memref_slice %arg2[%28, %c0_i32_63] : memref<64x128xf32, #tpu.memory_space<any>> -> memref<1x128xf32, #tpu.memory_space<any>>
    %c5_i32_64 = arith.constant 5 : i32
    %c0_i32_65 = arith.constant 0 : i32
    %92 = tpu.memref_slice %arg4[%c5_i32_64, %c0_i32_65] : memref<16x128xf32, #tpu.memory_space<vmem>> -> memref<1x128xf32, #tpu.memory_space<vmem>>
    tpu.wait_dma2 semaphore(%arg5 : memref<!tpu.dma_semaphore, #tpu.memory_space<semaphore_mem>>) src(%91 : memref<1x128xf32, #tpu.memory_space<any>>) dst(%92 : memref<1x128xf32, #tpu.memory_space<vmem>>)
    %c0_i32_66 = arith.constant 0 : i32
    %93 = tpu.memref_slice %arg2[%33, %c0_i32_66] : memref<64x128xf32, #tpu.memory_space<any>> -> memref<1x128xf32, #tpu.memory_space<any>>
    %c6_i32_67 = arith.constant 6 : i32
    %c0_i32_68 = arith.constant 0 : i32
    %94 = tpu.memref_slice %arg4[%c6_i32_67, %c0_i32_68] : memref<16x128xf32, #tpu.memory_space<vmem>> -> memref<1x128xf32, #tpu.memory_space<vmem>>
    tpu.wait_dma2 semaphore(%arg5 : memref<!tpu.dma_semaphore, #tpu.memory_space<semaphore_mem>>) src(%93 : memref<1x128xf32, #tpu.memory_space<any>>) dst(%94 : memref<1x128xf32, #tpu.memory_space<vmem>>)
    %c0_i32_69 = arith.constant 0 : i32
    %95 = tpu.memref_slice %arg2[%38, %c0_i32_69] : memref<64x128xf32, #tpu.memory_space<any>> -> memref<1x128xf32, #tpu.memory_space<any>>
    %c7_i32_70 = arith.constant 7 : i32
    %c0_i32_71 = arith.constant 0 : i32
    %96 = tpu.memref_slice %arg4[%c7_i32_70, %c0_i32_71] : memref<16x128xf32, #tpu.memory_space<vmem>> -> memref<1x128xf32, #tpu.memory_space<vmem>>
    tpu.wait_dma2 semaphore(%arg5 : memref<!tpu.dma_semaphore, #tpu.memory_space<semaphore_mem>>) src(%95 : memref<1x128xf32, #tpu.memory_space<any>>) dst(%96 : memref<1x128xf32, #tpu.memory_space<vmem>>)
    %c0_i32_72 = arith.constant 0 : i32
    %97 = tpu.memref_slice %arg2[%43, %c0_i32_72] : memref<64x128xf32, #tpu.memory_space<any>> -> memref<1x128xf32, #tpu.memory_space<any>>
    %c8_i32_73 = arith.constant 8 : i32
    %c0_i32_74 = arith.constant 0 : i32
    %98 = tpu.memref_slice %arg4[%c8_i32_73, %c0_i32_74] : memref<16x128xf32, #tpu.memory_space<vmem>> -> memref<1x128xf32, #tpu.memory_space<vmem>>
    tpu.wait_dma2 semaphore(%arg5 : memref<!tpu.dma_semaphore, #tpu.memory_space<semaphore_mem>>) src(%97 : memref<1x128xf32, #tpu.memory_space<any>>) dst(%98 : memref<1x128xf32, #tpu.memory_space<vmem>>)
    %c0_i32_75 = arith.constant 0 : i32
    %99 = tpu.memref_slice %arg2[%48, %c0_i32_75] : memref<64x128xf32, #tpu.memory_space<any>> -> memref<1x128xf32, #tpu.memory_space<any>>
    %c9_i32_76 = arith.constant 9 : i32
    %c0_i32_77 = arith.constant 0 : i32
    %100 = tpu.memref_slice %arg4[%c9_i32_76, %c0_i32_77] : memref<16x128xf32, #tpu.memory_space<vmem>> -> memref<1x128xf32, #tpu.memory_space<vmem>>
    tpu.wait_dma2 semaphore(%arg5 : memref<!tpu.dma_semaphore, #tpu.memory_space<semaphore_mem>>) src(%99 : memref<1x128xf32, #tpu.memory_space<any>>) dst(%100 : memref<1x128xf32, #tpu.memory_space<vmem>>)
    %c0_i32_78 = arith.constant 0 : i32
    %101 = tpu.memref_slice %arg2[%53, %c0_i32_78] : memref<64x128xf32, #tpu.memory_space<any>> -> memref<1x128xf32, #tpu.memory_space<any>>
    %c10_i32_79 = arith.constant 10 : i32
    %c0_i32_80 = arith.constant 0 : i32
    %102 = tpu.memref_slice %arg4[%c10_i32_79, %c0_i32_80] : memref<16x128xf32, #tpu.memory_space<vmem>> -> memref<1x128xf32, #tpu.memory_space<vmem>>
    tpu.wait_dma2 semaphore(%arg5 : memref<!tpu.dma_semaphore, #tpu.memory_space<semaphore_mem>>) src(%101 : memref<1x128xf32, #tpu.memory_space<any>>) dst(%102 : memref<1x128xf32, #tpu.memory_space<vmem>>)
    %c0_i32_81 = arith.constant 0 : i32
    %103 = tpu.memref_slice %arg2[%58, %c0_i32_81] : memref<64x128xf32, #tpu.memory_space<any>> -> memref<1x128xf32, #tpu.memory_space<any>>
    %c11_i32_82 = arith.constant 11 : i32
    %c0_i32_83 = arith.constant 0 : i32
    %104 = tpu.memref_slice %arg4[%c11_i32_82, %c0_i32_83] : memref<16x128xf32, #tpu.memory_space<vmem>> -> memref<1x128xf32, #tpu.memory_space<vmem>>
    tpu.wait_dma2 semaphore(%arg5 : memref<!tpu.dma_semaphore, #tpu.memory_space<semaphore_mem>>) src(%103 : memref<1x128xf32, #tpu.memory_space<any>>) dst(%104 : memref<1x128xf32, #tpu.memory_space<vmem>>)
    %c0_i32_84 = arith.constant 0 : i32
    %105 = tpu.memref_slice %arg2[%63, %c0_i32_84] : memref<64x128xf32, #tpu.memory_space<any>> -> memref<1x128xf32, #tpu.memory_space<any>>
    %c12_i32_85 = arith.constant 12 : i32
    %c0_i32_86 = arith.constant 0 : i32
    %106 = tpu.memref_slice %arg4[%c12_i32_85, %c0_i32_86] : memref<16x128xf32, #tpu.memory_space<vmem>> -> memref<1x128xf32, #tpu.memory_space<vmem>>
    tpu.wait_dma2 semaphore(%arg5 : memref<!tpu.dma_semaphore, #tpu.memory_space<semaphore_mem>>) src(%105 : memref<1x128xf32, #tpu.memory_space<any>>) dst(%106 : memref<1x128xf32, #tpu.memory_space<vmem>>)
    %c0_i32_87 = arith.constant 0 : i32
    %107 = tpu.memref_slice %arg2[%68, %c0_i32_87] : memref<64x128xf32, #tpu.memory_space<any>> -> memref<1x128xf32, #tpu.memory_space<any>>
    %c13_i32_88 = arith.constant 13 : i32
    %c0_i32_89 = arith.constant 0 : i32
    %108 = tpu.memref_slice %arg4[%c13_i32_88, %c0_i32_89] : memref<16x128xf32, #tpu.memory_space<vmem>> -> memref<1x128xf32, #tpu.memory_space<vmem>>
    tpu.wait_dma2 semaphore(%arg5 : memref<!tpu.dma_semaphore, #tpu.memory_space<semaphore_mem>>) src(%107 : memref<1x128xf32, #tpu.memory_space<any>>) dst(%108 : memref<1x128xf32, #tpu.memory_space<vmem>>)
    %c0_i32_90 = arith.constant 0 : i32
    %109 = tpu.memref_slice %arg2[%73, %c0_i32_90] : memref<64x128xf32, #tpu.memory_space<any>> -> memref<1x128xf32, #tpu.memory_space<any>>
    %c14_i32_91 = arith.constant 14 : i32
    %c0_i32_92 = arith.constant 0 : i32
    %110 = tpu.memref_slice %arg4[%c14_i32_91, %c0_i32_92] : memref<16x128xf32, #tpu.memory_space<vmem>> -> memref<1x128xf32, #tpu.memory_space<vmem>>
    tpu.wait_dma2 semaphore(%arg5 : memref<!tpu.dma_semaphore, #tpu.memory_space<semaphore_mem>>) src(%109 : memref<1x128xf32, #tpu.memory_space<any>>) dst(%110 : memref<1x128xf32, #tpu.memory_space<vmem>>)
    %c0_i32_93 = arith.constant 0 : i32
    %111 = tpu.memref_slice %arg2[%78, %c0_i32_93] : memref<64x128xf32, #tpu.memory_space<any>> -> memref<1x128xf32, #tpu.memory_space<any>>
    %c15_i32_94 = arith.constant 15 : i32
    %c0_i32_95 = arith.constant 0 : i32
    %112 = tpu.memref_slice %arg4[%c15_i32_94, %c0_i32_95] : memref<16x128xf32, #tpu.memory_space<vmem>> -> memref<1x128xf32, #tpu.memory_space<vmem>>
    tpu.wait_dma2 semaphore(%arg5 : memref<!tpu.dma_semaphore, #tpu.memory_space<semaphore_mem>>) src(%111 : memref<1x128xf32, #tpu.memory_space<any>>) dst(%112 : memref<1x128xf32, #tpu.memory_space<vmem>>)
    %c0 = arith.constant 0 : index
    %c0_96 = arith.constant 0 : index
    %113 = vector.load %arg4[%c0, %c0_96] : memref<16x128xf32, #tpu.memory_space<vmem>>, vector<16x128xf32>
    %c0_97 = arith.constant 0 : index
    %c0_98 = arith.constant 0 : index
    %114 = vector.load %arg3[%c0_97, %c0_98] : memref<16x128xf32, #tpu.memory_space<vmem>>, vector<16x128xf32>
    tpu.vector_store %arg3[%c0_97, %c0_98], %113 {strides = array<i32>} : memref<16x128xf32, #tpu.memory_space<vmem>>, vector<16x128xf32>,
    return
  }
  func.func @transform_1(%arg0: i32, %arg1: memref<16xi32, #tpu.memory_space<smem>>) -> (i32, i32) {
    %c0_i32 = arith.constant 0 : i32
    %c0_i32_0 = arith.constant 0 : i32
    return %arg0, %c0_i32 : i32, i32
  }
}

</mosaic_0001>

<llo_original>
// kernel: tpu_custom_call.1
$region0: #{tpu_custom_call.1}
  #allocation0 [shape = 'u32[]', space=smem, size = 0x4, offset = 0x4, fixed_abs, tag = 'smem constant byte address 0x4 - core index']
  #allocation1 [shape = 'u32[144,128]{1,0:T(1,128)}', space=vmem, size = 0x12000, scoped, tag = 'internal scratch']
  #allocation2 [shape = 'f32[16,128]{1,0:T(8,128)}', space=vmem, size = 0x2000, scoped, tag = 'scratch operand']
  #allocation3 [shape = 's32[1]{0}', space=sflag, size = 0x4, scoped, tag = 'scratch operand']
  #allocation4 [shape = 's32[1]{0}', space=sflag, size = 0x4, scoped, tag = 'scoped memory for tpu_custom_call.1']
  #allocation5 [shape = 'u8[512]{0}', space=smem, size = 0x200, scoped, tag = 'prefetched SMEM operand 0']
  #allocation8 [shape = 's32[]', space=sflag, size = 0x4, offset = 0, fixed_abs, tag = 'sflag constant byte address 0x0 - dummy sync flag']
  #allocation9 [shape = 's32[]', space=sflag, size = 0x4, offset = 0, fixed_abs, tag = 'sflag constant byte address 0x0 - dummy sync flag']
  #allocation10 [shape = 'u32[]', space=smem, size = 0x4, offset = 0x44, fixed_abs, tag = 'smem constant byte address 0x44 - assertion arg 0']
  #allocation11 [shape = 'u32[]', space=smem, size = 0x4, offset = 0x48, fixed_abs, tag = 'smem constant byte address 0x48 - assertion arg 1']
  #allocation12 [shape = 's32[]', space=sflag, size = 0x4, offset = 0, fixed_abs, tag = 'sflag constant byte address 0x0 - dummy sync flag']
  #allocation13 [shape = 's32[]', space=sflag, size = 0x4, offset = 0, fixed_abs, tag = 'sflag constant byte address 0x0 - dummy sync flag']
  #allocation14 [shape = 's32[]', space=sflag, size = 0x4, offset = 0, fixed_abs, tag = 'sflag constant byte address 0x0 - dummy sync flag']
  #allocation15 [shape = 's32[]', space=sflag, size = 0x4, offset = 0, fixed_abs, tag = 'sflag constant byte address 0x0 - dummy sync flag']
  #allocation16 [shape = 's32[]', space=sflag, size = 0x4, offset = 0, fixed_abs, tag = 'sflag constant byte address 0x0 - dummy sync flag']
  #allocation17 [shape = 's32[]', space=sflag, size = 0x4, offset = 0, fixed_abs, tag = 'sflag constant byte address 0x0 - dummy sync flag']
  #allocation18 [shape = 's32[]', space=sflag, size = 0x4, offset = 0, fixed_abs, tag = 'sflag constant byte address 0x0 - dummy sync flag']
  #allocation19 [shape = 's32[]', space=sflag, size = 0x4, offset = 0, fixed_abs, tag = 'sflag constant byte address 0x0 - dummy sync flag']
  #allocation20 [shape = 's32[]', space=sflag, size = 0x4, offset = 0, fixed_abs, tag = 'sflag constant byte address 0x0 - dummy sync flag']
  #allocation21 [shape = 's32[]', space=sflag, size = 0x4, offset = 0, fixed_abs, tag = 'sflag constant byte address 0x0 - dummy sync flag']
  #allocation22 [shape = 's32[]', space=sflag, size = 0x4, offset = 0, fixed_abs, tag = 'sflag constant byte address 0x0 - dummy sync flag']
  #allocation23 [shape = 's32[]', space=sflag, size = 0x4, offset = 0, fixed_abs, tag = 'sflag constant byte address 0x0 - dummy sync flag']
  #allocation24 [shape = 's32[]', space=sflag, size = 0x4, offset = 0, fixed_abs, tag = 'sflag constant byte address 0x0 - dummy sync flag']
  #allocation25 [shape = 's32[]', space=sflag, size = 0x4, offset = 0, fixed_abs, tag = 'sflag constant byte address 0x0 - dummy sync flag']
  #allocation26 [shape = 's32[]', space=sflag, size = 0x4, offset = 0, fixed_abs, tag = 'sflag constant byte address 0x0 - dummy sync flag']
  #allocation27 [shape = 's32[]', space=sflag, size = 0x4, offset = 0, fixed_abs, tag = 'sflag constant byte address 0x0 - dummy sync flag']
  #allocation28 [shape = 's32[]', space=sflag, size = 0x4, offset = 0, fixed_abs, tag = 'sflag constant byte address 0x0 - dummy sync flag']
  #allocation29 [shape = 's32[]', space=sflag, size = 0x4, offset = 0, fixed_abs, tag = 'sflag constant byte address 0x0 - dummy sync flag']
  #allocation30 [shape = 's32[]', space=sflag, size = 0x4, offset = 0, fixed_abs, tag = 'sflag constant byte address 0x0 - dummy sync flag']
  #allocation31 [shape = 's32[]', space=sflag, size = 0x4, offset = 0, fixed_abs, tag = 'sflag constant byte address 0x0 - dummy sync flag']
  #allocation32 [shape = 's32[]', space=sflag, size = 0x4, offset = 0, fixed_abs, tag = 'sflag constant byte address 0x0 - dummy sync flag']
  #allocation33 [shape = 's32[]', space=sflag, size = 0x4, offset = 0, fixed_abs, tag = 'sflag constant byte address 0x0 - dummy sync flag']
  #allocation34 [shape = 's32[]', space=sflag, size = 0x4, offset = 0, fixed_abs, tag = 'sflag constant byte address 0x0 - dummy sync flag']
  #allocation35 [shape = 's32[]', space=sflag, size = 0x4, offset = 0, fixed_abs, tag = 'sflag constant byte address 0x0 - dummy sync flag']
  #allocation36 [shape = 's32[]', space=sflag, size = 0x4, offset = 0, fixed_abs, tag = 'sflag constant byte address 0x0 - dummy sync flag']
  #allocation37 [shape = 's32[]', space=sflag, size = 0x4, offset = 0, fixed_abs, tag = 'sflag constant byte address 0x0 - dummy sync flag']
  #allocation38 [shape = 's32[]', space=sflag, size = 0x4, offset = 0, fixed_abs, tag = 'sflag constant byte address 0x0 - dummy sync flag']
  #allocation39 [shape = 's32[]', space=sflag, size = 0x4, offset = 0, fixed_abs, tag = 'sflag constant byte address 0x0 - dummy sync flag']
  #allocation40 [shape = 's32[]', space=sflag, size = 0x4, offset = 0, fixed_abs, tag = 'sflag constant byte address 0x0 - dummy sync flag']
  #allocation41 [shape = 's32[]', space=sflag, size = 0x4, offset = 0, fixed_abs, tag = 'sflag constant byte address 0x0 - dummy sync flag']
  %s0 = inlined_call_operand.hbm [shape: s32[16], index: 0, kind: input, shape index: {}]
  %s1 = inlined_call_operand.hbm [shape: f32[64,128], index: 1, kind: input, shape index: {}]
  %s2 = inlined_call_operand.hbm [shape: f32[16,128], index: 2, kind: output, shape index: {}]
  %s3 = sld [smem:[#allocation0]]
  $region74: #{tpu_custom_call.1} parent=0
    _
  %s5 = ssub.s32 1, %s3
  %s6 = scalar_select 0, %s5, %s3
  %8 = dma.hbm_to_smem %s0, 16, [#allocation5], [#allocation4]
  %9 = dma.done [#allocation4], 16
  %10 = sfence
  $region1: #{tpu_custom_call.1} parent=0
    #allocation6 [shape = 'u8[8192]{0}', space=vmem, size = 0x2000, scoped, tag = 'output window, operand 0, single buffered']
    #allocation7 [shape = 's32[1]{0}', space=sflag, size = 0x4, scoped, tag = 'scoped memory for tpu_custom_call.1']
    %11 = vsyncpa [#allocation7], 0
    %s12 = smul.u32 0, 16
    %s13 = sld [smem:[#allocation5 + %s12]]
    %s14 = smul.addr %s13, 16
    %s15 = scalar_lea.hbm %s1, %s14
    // Predicated region
    $region2: #{tpu_custom_call.1} parent=1 // pred_check
      _
    $region3: #{tpu_custom_call.1} parent=1 // pred_check_branch
      %17 = sbr.rel target = $region5
    $region4: #{tpu_custom_call.1} parent=1 // pred_region
      %18 = sst [smem:[#allocation10]] [#allocation9]
      %19 = sst [smem:[#allocation11]] [#allocation8]
    $region5: #{tpu_custom_call.1} parent=1 // pred_fallthru
      _
    %21 = shalt.err (0)
    %s23 = sshll.u32 [#allocation2], 4
    %s24 = int_to_ptr.vmem [resolvable:$true] %s23
    %26 = dma.hbm_to_vmem [thread:$0]  %s15, 16, %s24, [#allocation3]
    %s27 = sadd.s32 %s12, 1
    %s28 = sld [smem:[#allocation5 + %s27]]
    %s29 = smul.addr %s28, 16
    %s30 = scalar_lea.hbm %s1, %s29
    %s31 = scalar_lea.vmem [#allocation2], 1
    // Predicated region
    $region6: #{tpu_custom_call.1} parent=1 // pred_check
      _
    $region7: #{tpu_custom_call.1} parent=1 // pred_check_branch
      %33 = sbr.rel target = $region9
    $region8: #{tpu_custom_call.1} parent=1 // pred_region
      %34 = sst [smem:[#allocation10]] [#allocation13]
      %35 = sst [smem:[#allocation11]] [#allocation12]
    $region9: #{tpu_custom_call.1} parent=1 // pred_fallthru
      _
    %37 = shalt.err (0)
    %s39 = sshll.u32 %s31, 4
    %s40 = int_to_ptr.vmem [resolvable:$true] %s39
    %42 = dma.hbm_to_vmem [thread:$0]  %s30, 16, %s40, [#allocation3]
    %s43 = sadd.s32 %s12, 2
    %s44 = sld [smem:[#allocation5 + %s43]]
    %s45 = smul.addr %s44, 16
    %s46 = scalar_lea.hbm %s1, %s45
    %s47 = scalar_lea.vmem [#allocation2], 2
    // Predicated region
    $region10: #{tpu_custom_call.1} parent=1 // pred_check
      _
    $region11: #{tpu_custom_call.1} parent=1 // pred_check_branch
      %49 = sbr.rel target = $region13
    $region12: #{tpu_custom_call.1} parent=1 // pred_region
      %50 = sst [smem:[#allocation10]] [#allocation15]
      %51 = sst [smem:[#allocation11]] [#allocation14]
    $region13: #{tpu_custom_call.1} parent=1 // pred_fallthru
      _
    %53 = shalt.err (0)
    %s55 = sshll.u32 %s47, 4
    %s56 = int_to_ptr.vmem [resolvable:$true] %s55
    %58 = dma.hbm_to_vmem [thread:$0]  %s46, 16, %s56, [#allocation3]
    %s59 = sadd.s32 %s12, 3
    %s60 = sld [smem:[#allocation5 + %s59]]
    %s61 = smul.addr %s60, 16
    %s62 = scalar_lea.hbm %s1, %s61
    %s63 = scalar_lea.vmem [#allocation2], 3
    // Predicated region
    $region14: #{tpu_custom_call.1} parent=1 // pred_check
      _
    $region15: #{tpu_custom_call.1} parent=1 // pred_check_branch
      %65 = sbr.rel target = $region17
    $region16: #{tpu_custom_call.1} parent=1 // pred_region
      %66 = sst [smem:[#allocation10]] [#allocation17]
      %67 = sst [smem:[#allocation11]] [#allocation16]
    $region17: #{tpu_custom_call.1} parent=1 // pred_fallthru
      _
    %69 = shalt.err (0)
    %s71 = sshll.u32 %s63, 4
    %s72 = int_to_ptr.vmem [resolvable:$true] %s71
    %74 = dma.hbm_to_vmem [thread:$0]  %s62, 16, %s72, [#allocation3]
    %s75 = sadd.s32 %s12, 4
    %s76 = sld [smem:[#allocation5 + %s75]]
    %s77 = smul.addr %s76, 16
    %s78 = scalar_lea.hbm %s1, %s77
    %s79 = scalar_lea.vmem [#allocation2], 4
    // Predicated region
    $region18: #{tpu_custom_call.1} parent=1 // pred_check
      _
    $region19: #{tpu_custom_call.1} parent=1 // pred_check_branch
      %81 = sbr.rel target = $region21
    $region20: #{tpu_custom_call.1} parent=1 // pred_region
      %82 = sst [smem:[#allocation10]] [#allocation19]
      %83 = sst [smem:[#allocation11]] [#allocation18]
    $region21: #{tpu_custom_call.1} parent=1 // pred_fallthru
      _
    %85 = shalt.err (0)
    %s87 = sshll.u32 %s79, 4
    %s88 = int_to_ptr.vmem [resolvable:$true] %s87
    %90 = dma.hbm_to_vmem [thread:$0]  %s78, 16, %s88, [#allocation3]
    %s91 = sadd.s32 %s12, 5
    %s92 = sld [smem:[#allocation5 + %s91]]
    %s93 = smul.addr %s92, 16
    %s94 = scalar_lea.hbm %s1, %s93
    %s95 = scalar_lea.vmem [#allocation2], 5
    // Predicated region
    $region22: #{tpu_custom_call.1} parent=1 // pred_check
      _
    $region23: #{tpu_custom_call.1} parent=1 // pred_check_branch
      %97 = sbr.rel target = $region25
    $region24: #{tpu_custom_call.1} parent=1 // pred_region
      %98 = sst [smem:[#allocation10]] [#allocation21]
      %99 = sst [smem:[#allocation11]] [#allocation20]
    $region25: #{tpu_custom_call.1} parent=1 // pred_fallthru
      _
    %101 = shalt.err (0)
    %s103 = sshll.u32 %s95, 4
    %s104 = int_to_ptr.vmem [resolvable:$true] %s103
    %106 = dma.hbm_to_vmem [thread:$0]  %s94, 16, %s104, [#allocation3]
    %s107 = sadd.s32 %s12, 6
    %s108 = sld [smem:[#allocation5 + %s107]]
    %s109 = smul.addr %s108, 16
    %s110 = scalar_lea.hbm %s1, %s109
    %s111 = scalar_lea.vmem [#allocation2], 6
    // Predicated region
    $region26: #{tpu_custom_call.1} parent=1 // pred_check
      _
    $region27: #{tpu_custom_call.1} parent=1 // pred_check_branch
      %113 = sbr.rel target = $region29
    $region28: #{tpu_custom_call.1} parent=1 // pred_region
      %114 = sst [smem:[#allocation10]] [#allocation23]
      %115 = sst [smem:[#allocation11]] [#allocation22]
    $region29: #{tpu_custom_call.1} parent=1 // pred_fallthru
      _
    %117 = shalt.err (0)
    %s119 = sshll.u32 %s111, 4
    %s120 = int_to_ptr.vmem [resolvable:$true] %s119
    %122 = dma.hbm_to_vmem [thread:$0]  %s110, 16, %s120, [#allocation3]
    %s123 = sadd.s32 %s12, 7
    %s124 = sld [smem:[#allocation5 + %s123]]
    %s125 = smul.addr %s124, 16
    %s126 = scalar_lea.hbm %s1, %s125
    %s127 = scalar_lea.vmem [#allocation2], 7
    // Predicated region
    $region30: #{tpu_custom_call.1} parent=1 // pred_check
      _
    $region31: #{tpu_custom_call.1} parent=1 // pred_check_branch
      %129 = sbr.rel target = $region33
    $region32: #{tpu_custom_call.1} parent=1 // pred_region
      %130 = sst [smem:[#allocation10]] [#allocation25]
      %131 = sst [smem:[#allocation11]] [#allocation24]
    $region33: #{tpu_custom_call.1} parent=1 // pred_fallthru
      _
    %133 = shalt.err (0)
    %s135 = sshll.u32 %s127, 4
    %s136 = int_to_ptr.vmem [resolvable:$true] %s135
    %138 = dma.hbm_to_vmem [thread:$0]  %s126, 16, %s136, [#allocation3]
    %s139 = sadd.s32 %s12, 8
    %s140 = sld [smem:[#allocation5 + %s139]]
    %s141 = smul.addr %s140, 16
    %s142 = scalar_lea.hbm %s1, %s141
    %s143 = scalar_lea.vmem [#allocation2], 8
    // Predicated region
    $region34: #{tpu_custom_call.1} parent=1 // pred_check
      _
    $region35: #{tpu_custom_call.1} parent=1 // pred_check_branch
      %145 = sbr.rel target = $region37
    $region36: #{tpu_custom_call.1} parent=1 // pred_region
      %146 = sst [smem:[#allocation10]] [#allocation27]
      %147 = sst [smem:[#allocation11]] [#allocation26]
    $region37: #{tpu_custom_call.1} parent=1 // pred_fallthru
      _
    %149 = shalt.err (0)
    %s151 = sshll.u32 %s143, 4
    %s152 = int_to_ptr.vmem [resolvable:$true] %s151
    %154 = dma.hbm_to_vmem [thread:$0]  %s142, 16, %s152, [#allocation3]
    %s155 = sadd.s32 %s12, 9
    %s156 = sld [smem:[#allocation5 + %s155]]
    %s157 = smul.addr %s156, 16
    %s158 = scalar_lea.hbm %s1, %s157
    %s159 = scalar_lea.vmem [#allocation2], 9
    // Predicated region
    $region38: #{tpu_custom_call.1} parent=1 // pred_check
      _
    $region39: #{tpu_custom_call.1} parent=1 // pred_check_branch
      %161 = sbr.rel target = $region41
    $region40: #{tpu_custom_call.1} parent=1 // pred_region
      %162 = sst [smem:[#allocation10]] [#allocation29]
      %163 = sst [smem:[#allocation11]] [#allocation28]
    $region41: #{tpu_custom_call.1} parent=1 // pred_fallthru
      _
    %165 = shalt.err (0)
    %s167 = sshll.u32 %s159, 4
    %s168 = int_to_ptr.vmem [resolvable:$true] %s167
    %170 = dma.hbm_to_vmem [thread:$0]  %s158, 16, %s168, [#allocation3]
    %s171 = sadd.s32 %s12, 10
    %s172 = sld [smem:[#allocation5 + %s171]]
    %s173 = smul.addr %s172, 16
    %s174 = scalar_lea.hbm %s1, %s173
    %s175 = scalar_lea.vmem [#allocation2], 10
    // Predicated region
    $region42: #{tpu_custom_call.1} parent=1 // pred_check
      _
    $region43: #{tpu_custom_call.1} parent=1 // pred_check_branch
      %177 = sbr.rel target = $region45
    $region44: #{tpu_custom_call.1} parent=1 // pred_region
      %178 = sst [smem:[#allocation10]] [#allocation31]
      %179 = sst [smem:[#allocation11]] [#allocation30]
    $region45: #{tpu_custom_call.1} parent=1 // pred_fallthru
      _
    %181 = shalt.err (0)
    %s183 = sshll.u32 %s175, 4
    %s184 = int_to_ptr.vmem [resolvable:$true] %s183
    %186 = dma.hbm_to_vmem [thread:$0]  %s174, 16, %s184, [#allocation3]
    %s187 = sadd.s32 %s12, 11
    %s188 = sld [smem:[#allocation5 + %s187]]
    %s189 = smul.addr %s188, 16
    %s190 = scalar_lea.hbm %s1, %s189
    %s191 = scalar_lea.vmem [#allocation2], 11
    // Predicated region
    $region46: #{tpu_custom_call.1} parent=1 // pred_check
      _
    $region47: #{tpu_custom_call.1} parent=1 // pred_check_branch
      %193 = sbr.rel target = $region49
    $region48: #{tpu_custom_call.1} parent=1 // pred_region
      %194 = sst [smem:[#allocation10]] [#allocation33]
      %195 = sst [smem:[#allocation11]] [#allocation32]
    $region49: #{tpu_custom_call.1} parent=1 // pred_fallthru
      _
    %197 = shalt.err (0)
    %s199 = sshll.u32 %s191, 4
    %s200 = int_to_ptr.vmem [resolvable:$true] %s199
    %202 = dma.hbm_to_vmem [thread:$0]  %s190, 16, %s200, [#allocation3]
    %s203 = sadd.s32 %s12, 12
    %s204 = sld [smem:[#allocation5 + %s203]]
    %s205 = smul.addr %s204, 16
    %s206 = scalar_lea.hbm %s1, %s205
    %s207 = scalar_lea.vmem [#allocation2], 12
    // Predicated region
    $region50: #{tpu_custom_call.1} parent=1 // pred_check
      _
    $region51: #{tpu_custom_call.1} parent=1 // pred_check_branch
      %209 = sbr.rel target = $region53
    $region52: #{tpu_custom_call.1} parent=1 // pred_region
      %210 = sst [smem:[#allocation10]] [#allocation35]
      %211 = sst [smem:[#allocation11]] [#allocation34]
    $region53: #{tpu_custom_call.1} parent=1 // pred_fallthru
      _
    %213 = shalt.err (0)
    %s215 = sshll.u32 %s207, 4
    %s216 = int_to_ptr.vmem [resolvable:$true] %s215
    %218 = dma.hbm_to_vmem [thread:$0]  %s206, 16, %s216, [#allocation3]
    %s219 = sadd.s32 %s12, 13
    %s220 = sld [smem:[#allocation5 + %s219]]
    %s221 = smul.addr %s220, 16
    %s222 = scalar_lea.hbm %s1, %s221
    %s223 = scalar_lea.vmem [#allocation2], 13
    // Predicated region
    $region54: #{tpu_custom_call.1} parent=1 // pred_check
      _
    $region55: #{tpu_custom_call.1} parent=1 // pred_check_branch
      %225 = sbr.rel target = $region57
    $region56: #{tpu_custom_call.1} parent=1 // pred_region
      %226 = sst [smem:[#allocation10]] [#allocation37]
      %227 = sst [smem:[#allocation11]] [#allocation36]
    $region57: #{tpu_custom_call.1} parent=1 // pred_fallthru
      _
    %229 = shalt.err (0)
    %s231 = sshll.u32 %s223, 4
    %s232 = int_to_ptr.vmem [resolvable:$true] %s231
    %234 = dma.hbm_to_vmem [thread:$0]  %s222, 16, %s232, [#allocation3]
    %s235 = sadd.s32 %s12, 14
    %s236 = sld [smem:[#allocation5 + %s235]]
    %s237 = smul.addr %s236, 16
    %s238 = scalar_lea.hbm %s1, %s237
    %s239 = scalar_lea.vmem [#allocation2], 14
    // Predicated region
    $region58: #{tpu_custom_call.1} parent=1 // pred_check
      _
    $region59: #{tpu_custom_call.1} parent=1 // pred_check_branch
      %241 = sbr.rel target = $region61
    $region60: #{tpu_custom_call.1} parent=1 // pred_region
      %242 = sst [smem:[#allocation10]] [#allocation39]
      %243 = sst [smem:[#allocation11]] [#allocation38]
    $region61: #{tpu_custom_call.1} parent=1 // pred_fallthru
      _
    %245 = shalt.err (0)
    %s247 = sshll.u32 %s239, 4
    %s248 = int_to_ptr.vmem [resolvable:$true] %s247
    %250 = dma.hbm_to_vmem [thread:$0]  %s238, 16, %s248, [#allocation3]
    %s251 = sadd.s32 %s12, 15
    %s252 = sld [smem:[#allocation5 + %s251]]
    %s253 = smul.addr %s252, 16
    %s254 = scalar_lea.hbm %s1, %s253
    %s255 = scalar_lea.vmem [#allocation2], 15
    // Predicated region
    $region62: #{tpu_custom_call.1} parent=1 // pred_check
      _
    $region63: #{tpu_custom_call.1} parent=1 // pred_check_branch
      %257 = sbr.rel target = $region65
    $region64: #{tpu_custom_call.1} parent=1 // pred_region
      %258 = sst [smem:[#allocation10]] [#allocation41]
      %259 = sst [smem:[#allocation11]] [#allocation40]
    $region65: #{tpu_custom_call.1} parent=1 // pred_fallthru
      _
    %261 = shalt.err (0)
    %s263 = sshll.u32 %s255, 4
    %s264 = int_to_ptr.vmem [resolvable:$true] %s263
    %266 = dma.hbm_to_vmem [thread:$0]  %s254, 16, %s264, [#allocation3]
    %s267 = smul.u32 1, 1
    %s268 = sshll.u32 %s267, 4
    %269 = dma.done [#allocation3], %s268
    %s270 = sshll.u32 %s267, 4
    %271 = dma.done [#allocation3], %s270
    %s272 = sshll.u32 %s267, 4
    %273 = dma.done [#allocation3], %s272
    %s274 = sshll.u32 %s267, 4
    %275 = dma.done [#allocation3], %s274
    %s276 = sshll.u32 %s267, 4
    %277 = dma.done [#allocation3], %s276
    %s278 = sshll.u32 %s267, 4
    %279 = dma.done [#allocation3], %s278
    %s280 = sshll.u32 %s267, 4
    %281 = dma.done [#allocation3], %s280
    %s282 = sshll.u32 %s267, 4
    %283 = dma.done [#allocation3], %s282
    %s284 = sshll.u32 %s267, 4
    %285 = dma.done [#allocation3], %s284
    %s286 = sshll.u32 %s267, 4
    %287 = dma.done [#allocation3], %s286
    %s288 = sshll.u32 %s267, 4
    %289 = dma.done [#allocation3], %s288
    %s290 = sshll.u32 %s267, 4
    %291 = dma.done [#allocation3], %s290
    %s292 = sshll.u32 %s267, 4
    %293 = dma.done [#allocation3], %s292
    %s294 = sshll.u32 %s267, 4
    %295 = dma.done [#allocation3], %s294
    %s296 = sshll.u32 %s267, 4
    %297 = dma.done [#allocation3], %s296
    %s298 = sshll.u32 %s267, 4
    %299 = dma.done [#allocation3], %s298
    %v300 = vld [vmem:[#allocation2] sm:$0xff]
    %v301 = vld [vmem:[#allocation2 + $0x8] sm:$0xff]
    %302 = vst [vmem:[#allocation6] sm:$0xff] %v300
    %303 = vst [vmem:[#allocation6 + $0x8] sm:$0xff] %v301
    // Predicated region
    $region66: #{tpu_custom_call.1} parent=1 // pred_check
      _
    $region67: #{tpu_custom_call.1} parent=1 // pred_check_branch
      %305 = sbr.rel (0) target = $region69
    $region68: #{tpu_custom_call.1} parent=1 // pred_region
      %s307 = ssub.s32 256, 256
      %308 = vsyncadd [#allocation7], %s307
      %s309 = sshll.u32 [#allocation6], 4
      %s310 = int_to_ptr.vmem [resolvable:$true] %s309
      %315 = dma.vmem_to_hbm [thread:$0]  %s310, 256, %s2, [#allocation7], 128, 128, 8
    $region69: #{tpu_custom_call.1} parent=1 // pred_fallthru
      _
    // Predicated region
    $region70: #{tpu_custom_call.1} parent=1 // pred_check
      _
    $region71: #{tpu_custom_call.1} parent=1 // pred_check_branch
      %317 = sbr.rel (0) target = $region73
    $region72: #{tpu_custom_call.1} parent=1 // pred_region
      %318 = dma.done [#allocation7], 256
    $region73: #{tpu_custom_call.1} parent=1 // pred_fallthru
      _
    %319 = vsyncpa [#allocation7], 1
  %320 = vsyncmov [#allocation3]
  %s321 = vpop.sfrf %320
  %p322 = scmp.eq.s32.totalorder %s321, 0
  %p323 = pneg %p322
  %325 = shalt.err (%p323)

</llo_original>
